<compile_context>
chip_gen: v7x
topology: tpu7x:2x2x1
jax: 0.10.0
libtpu: 0.0.40
codegen_flags: <defaults>
</compile_context>

<pallas_src>
import functools

import jax
import jax.numpy as jnp
from jax.experimental import pallas as pl
from jax.experimental.pallas import tpu as pltpu

_MiB = 1024 * 1024
_LANE = 128


# ---------------------------------------------------------------------------
# Tiling / VMEM configuration
# ---------------------------------------------------------------------------
@functools.lru_cache(maxsize=1)
def _hw_config():
    """(tile_budget_bytes, vmem_limit_bytes) keyed by TPU generation."""
    kind = ""
    try:
        kind = jax.devices()[0].device_kind.lower()
    except Exception:
        pass
    if "v6" in kind:        # 128 MiB physical VMEM, fast HBM -> big tiles
        return 8 * _MiB, 64 * _MiB
    if "v5" in kind:        # 128 MiB physical, 16 MiB scoped default -> raise it
        return 6 * _MiB, 48 * _MiB
    # v7x (64 MiB physical VMEM) and unknown chips: stay conservative.
    return 4 * _MiB, 32 * _MiB


def _pick_tiles(rows, hw, itemsize, tile_budget_bytes):
    """Pick a (Rt, T) block for a (rows, hw) array.

    T is a multiple of 128 (or == hw when hw < 128); Rt is a multiple of the
    sublane packing (8/16/32 for 4/2/1-byte dtypes) or == rows when rows is
    small.  Rt * T * itemsize stays under tile_budget_bytes, so with
    double-buffered input + output the scoped-VMEM use is ~4x that budget.
    """
    sub = {4: 8, 2: 16, 1: 32}.get(itemsize, 8)
    rt_min = rows if rows <= sub else sub

    if hw <= _LANE:
        t = hw                                           # full-dim block (exempt)
    else:
        hw_pad = pl.cdiv(hw, _LANE) * _LANE
        max_t = max(_LANE,
                    (tile_budget_bytes // max(1, rt_min * itemsize))
                    // _LANE * _LANE)
        t = min(hw_pad, max_t)

    if rows <= sub:
        rt = rows
    else:
        max_rt = max(sub,
                     (tile_budget_bytes // max(1, t * itemsize)) // sub * sub)
        rt = min((rows // sub) * sub, max_rt)
    return rt, t


# ---------------------------------------------------------------------------
# Kernels
# ---------------------------------------------------------------------------
def _affine_kernel(x_ref, scale_ref, bias_ref, y_ref):
    """y = x * scale + bias, per-row broadcast over lanes.

    x_ref/y_ref: (Rt, T) tiles of the (N*C, HW) array.
    scale_ref/bias_ref: (Rt, 1) f32 per-row parameters.
    """
    # TODO(synk): on v6e/v7x the multiply-add could stay in bf16 to halve vreg
    # pressure; kept in f32 for v5e compatibility (kernel is HBM-bound anyway).
    x = x_ref[...].astype(jnp.float32)
    y_ref[...] = (x * scale_ref[...] + bias_ref[...]).astype(y_ref.dtype)


def _stats_kernel(x_ref, mean_ref, m2_ref, *, hw, t):
    """Streaming per-row mean / M2 (Chan's parallel-variance merge).

    x_ref:    (Rt, T) tile of the (N*C, HW) input
    mean_ref: (Rt, 1) f32 running mean (resident across the HW grid axis)
    m2_ref:   (Rt, 1) f32 running sum of squared deviations
    Padded lanes (HW not a multiple of T) are masked out.
    """
    j = pl.program_id(1)

    @pl.when(j == 0)
    def _():
        mean_ref[...] = jnp.zeros_like(mean_ref)
        m2_ref[...] = jnp.zeros_like(m2_ref)

    x = x_ref[...].astype(jnp.float32)                       # (Rt, T)
    start = j * t
    lane = jax.lax.broadcasted_iota(jnp.int32, x.shape, 1)
    valid = (start + lane) < hw

    cnt_b = jnp.minimum(jnp.int32(t), hw - start).astype(jnp.float32)
    xv = jnp.where(valid, x, 0.0)
    mean_b = jnp.sum(xv, axis=-1, keepdims=True) / cnt_b     # (Rt, 1)
    d = jnp.where(valid, x - mean_b, 0.0)
    m2_b = jnp.sum(d * d, axis=-1, keepdims=True)            # (Rt, 1)

    cnt_a = start.astype(jnp.float32)
    n_new = cnt_a + cnt_b
    delta = mean_b - mean_ref[...]
    mean_ref[...] += delta * (cnt_b / n_new)
    m2_ref[...] += m2_b + delta * delta * (cnt_a * cnt_b / n_new)


# ---------------------------------------------------------------------------
# Pallas wrappers
# ---------------------------------------------------------------------------
def _affine_2d(x2d, scale_rows, bias_rows):
    """x2d: (N*C, HW); scale_rows/bias_rows: (N*C, 1) f32. Returns (N*C, HW)."""
    R, HW = x2d.shape
    budget, vmem_limit = _hw_config()
    rt, t = _pick_tiles(R, HW, x2d.dtype.itemsize, budget)
    grid = (pl.cdiv(R, rt), pl.cdiv(HW, t))

    # TODO(synk): sweep pipeline_mode=pl.Buffered(3) on x for v7x if profiling
    # shows exposed DMA latency (not enabled by default to respect 64 MiB VMEM).
    return pl.pallas_call(
        _affine_kernel,
        out_shape=jax.ShapeDtypeStruct((R, HW), x2d.dtype),
        grid=grid,
        in_specs=[
            pl.BlockSpec((rt, t), lambda i, j: (i, j)),
            pl.BlockSpec((rt, 1), lambda i, j: (i, 0)),
            pl.BlockSpec((rt, 1), lambda i, j: (i, 0)),
        ],
        out_specs=pl.BlockSpec((rt, t), lambda i, j: (i, j)),
        compiler_params=pltpu.CompilerParams(
            dimension_semantics=("parallel", "parallel"),
            vmem_limit_bytes=vmem_limit),
    )(x2d, scale_rows, bias_rows)


def _channel_stats(x2d, n, c, hw):
    """Per-channel (mean, M2) over batch+spatial. x2d: (N*C, HW)."""
    R = x2d.shape[0]
    budget, vmem_limit = _hw_config()
    rt, t = _pick_tiles(R, hw, x2d.dtype.itemsize, budget)
    grid = (pl.cdiv(R, rt), pl.cdiv(hw, t))

    mean_rows, m2_rows = pl.pallas_call(
        functools.partial(_stats_kernel, hw=hw, t=t),
        out_shape=(jax.ShapeDtypeStruct((R, 1), jnp.float32),
                   jax.ShapeDtypeStruct((R, 1), jnp.float32)),
        grid=grid,
        in_specs=[pl.BlockSpec((rt, t), lambda i, j: (i, j))],
        out_specs=(pl.BlockSpec((rt, 1), lambda i, j: (i, 0)),
                   pl.BlockSpec((rt, 1), lambda i, j: (i, 0))),
        compiler_params=pltpu.CompilerParams(
            # Row axis is embarrassingly parallel (per-row accumulators), so
            # v7x's 2 TensorCores split the stats pass; HW axis is the
            # resident-accumulator reduction -> "arbitrary".
            dimension_semantics=("parallel", "arbitrary"),
            vmem_limit_bytes=vmem_limit),
    )(x2d)

    # Combine per-(n, c) row statistics across the batch (Chan's merge with
    # equal counts hw per row).  Tiny; plain JAX.
    mean_nc = mean_rows.reshape(n, c)
    m2_nc = m2_rows.reshape(n, c)
    mean_c = jnp.mean(mean_nc, axis=0)                               # (C,)
    m2_c = jnp.sum(m2_nc, axis=0) \
        + jnp.float32(hw) * jnp.sum((mean_nc - mean_c) ** 2, axis=0)  # (C,)
    return mean_c, m2_c


# ---------------------------------------------------------------------------
# ActNorm forward paths
# ---------------------------------------------------------------------------
def _rows_params(s_c, t_c, n, c):
    scale_rows = jnp.tile(jnp.exp(s_c)[None, :], (n, 1)).reshape(n * c, 1)
    bias_rows = jnp.tile(t_c[None, :], (n, 1)).reshape(n * c, 1)
    return scale_rows, bias_rows


def actnorm_forward(z, s, t):
    """ActNorm.forward once init is done (== AffineFlow.forward).

    z: (N, C, H, W); s, t: (1, C, 1, 1). Returns (y, log_det).
    """
    N, C, H, W = z.shape
    HW = H * W
    x2d = z.reshape(N * C, HW)             # free reshape, no HBM transpose
    s_c = s.reshape(C).astype(jnp.float32)
    t_c = t.reshape(C).astype(jnp.float32)

    scale_rows, bias_rows = _rows_params(s_c, t_c, N, C)
    y2d = _affine_2d(x2d, scale_rows, bias_rows)
    log_det = jnp.float32(HW) * jnp.sum(s_c)
    return y2d.reshape(N, C, H, W), log_det


def actnorm_init_forward(z):
    """ActNorm.forward when init_done == 0.  Returns (y, s, t, log_det)."""
    N, C, H, W = z.shape
    HW = H * W
    M = N * HW
    x2d = z.reshape(N * C, HW)

    # TODO(synk): when the whole activation fits in VMEM, the stats + affine
    # passes could be fused to cut HBM traffic by ~33%; init runs once so the
    # two-pass form is kept for simplicity.
    mean_c, m2_c = _channel_stats(x2d, N, C, HW)
    var_c = m2_c / jnp.float32(max(M - 1, 1))            # unbiased (torch std)
    std_c = jnp.sqrt(jnp.maximum(var_c, 0.0))
    s_c = -jnp.log(std_c + 1e-6)                         # (C,)
    t_c = -mean_c * jnp.exp(s_c)                         # (C,)

    scale_rows, bias_rows = _rows_params(s_c, t_c, N, C)
    y2d = _affine_2d(x2d, scale_rows, bias_rows)
    log_det = jnp.float32(HW) * jnp.sum(s_c)

    return (y2d.reshape(N, C, H, W),
            s_c.reshape(1, C, 1, 1),
            t_c.reshape(1, C, 1, 1),
            log_det)


class ActNormPallas:
    """JAX/Pallas port of ActNorm(shape=(C, 1, 1)).

    s, t start at zeros (as in __init__); init_done starts False, so the first
    forward performs the data-dependent initialization before the affine map.
    """

    def __init__(self, shape):
        assert len(shape) == 3 and shape[1] == 1 and shape[2] == 1, \
            "this port implements the conv-style shape=(C,1,1) case"
        C = shape[0]
        self.s = jnp.zeros((1, C, 1, 1), jnp.float32)
        self.t = jnp.zeros((1, C, 1, 1), jnp.float32)
        # TODO(synk): init_done / parameter mutation is torch module state;
        # kept as Python-side state here rather than in-kernel buffers.
        self.init_done = False

    def forward(self, z):
        if not self.init_done:
            y, s, t, logdet = actnorm_init_forward(z)
            self.s, self.t = s, t
            self.init_done = True
            return y, logdet
        return actnorm_forward(z, self.s, self.t)


# ---------------------------------------------------------------------------
# Reference (plain JAX) for verification
# ---------------------------------------------------------------------------
def _reference_init_forward(z):
    mean = jnp.mean(z, axis=(0, 2, 3), keepdims=True)
    std = jnp.std(z, axis=(0, 2, 3), keepdims=True, ddof=1)   # torch unbiased
    s = -jnp.log(std + 1e-6)
    t = -mean * jnp.exp(s)
    y = z * jnp.exp(s) + t
    logdet = (z.shape[2] * z.shape[3]) * jnp.sum(s)
    return y, s, t, logdet


if __name__ == "__main__":
    key = jax.random.PRNGKey(0)
    N, C, H, W = 2, 4, 16, 16
    z = jax.random.normal(key, (N, C, H, W), dtype=jnp.float32) * 1.7 + 0.3

    mod = ActNormPallas(shape=(C, 1, 1))

    # First forward: data-dependent init + affine (the path torch takes).
    y1, logdet1 = mod.forward(z)
    jax.block_until_ready((y1, logdet1))

    # Second forward: plain affine with the stored s, t.
    y2, logdet2 = mod.forward(z)
    jax.block_until_ready((y2, logdet2))

    # Verify against a plain-JAX reference of the torch semantics.
    y_ref, s_ref, t_ref, ld_ref = _reference_init_forward(z)
    assert jnp.allclose(y1, y_ref, atol=1e-4, rtol=1e-4)
    assert jnp.allclose(mod.s, s_ref, atol=1e-4, rtol=1e-4)
    assert jnp.allclose(mod.t, t_ref, atol=1e-4, rtol=1e-4)
    assert jnp.allclose(logdet1, ld_ref, atol=1e-3, rtol=1e-4)
    assert jnp.allclose(y2, y_ref, atol=1e-4, rtol=1e-4)
    assert jnp.allclose(logdet2, ld_ref, atol=1e-3, rtol=1e-4)

    # bf16 streaming path (exercises dtype-aware tiling on the affine kernel).
    zb = z.astype(jnp.bfloat16)
    yb, _ = actnorm_forward(zb, mod.s, mod.t)
    jax.block_until_ready(yb)
    assert yb.dtype == jnp.bfloat16
    assert jnp.allclose(yb.astype(jnp.float32), y_ref, atol=1e-1, rtol=1e-1)

    print("KERNEL_OK")
</pallas_src>

<mosaic_0001>
module attributes {stable_mosaic.version = 11 : i64} {
  func.func @_stats_kernel(%arg0: i32, %arg1: i32, %arg2: memref<8x256xf32, #tpu.memory_space<vmem>>, %arg3: memref<8x1xf32, #tpu.memory_space<vmem>>, %arg4: memref<8x1xf32, #tpu.memory_space<vmem>>) attributes {dimension_semantics = [#tpu.dimension_semantics<parallel>, #tpu.dimension_semantics<arbitrary>], iteration_bounds = array<i64: 1, 1>, scalar_prefetch = 0 : i64, scratch_operands = 0 : i64, tpu.core_type = #tpu.core_type<tc>, window_params = [{transform_indices = @transform_0, window_bounds = array<i64: 8, 256>}, {transform_indices = @transform_1, window_bounds = array<i64: 8, 1>}, {transform_indices = @transform_2, window_bounds = array<i64: 8, 1>}]} {
    %c0_i32 = arith.constant 0 : i32
    %0 = arith.cmpi eq, %arg1, %c0_i32 : i32
    %1 = arith.extui %0 : i1 to i32
    %c0_i32_0 = arith.constant 0 : i32
    %2 = arith.cmpi ne, %1, %c0_i32_0 : i32
    scf.if %2 {
      %cst_18 = arith.constant 0.000000e+00 : f32
      %45 = vector.broadcast %cst_18 : f32 to vector<8x1xf32>
      %c0_19 = arith.constant 0 : index
      %c0_20 = arith.constant 0 : index
      %46 = vector.load %arg3[%c0_19, %c0_20] : memref<8x1xf32, #tpu.memory_space<vmem>>, vector<8x1xf32>
      tpu.vector_store %arg3[%c0_19, %c0_20], %45 {strides = array<i32>} : memref<8x1xf32, #tpu.memory_space<vmem>>, vector<8x1xf32>,
      %cst_21 = arith.constant 0.000000e+00 : f32
      %47 = vector.broadcast %cst_21 : f32 to vector<8x1xf32>
      %c0_22 = arith.constant 0 : index
      %c0_23 = arith.constant 0 : index
      %48 = vector.load %arg4[%c0_22, %c0_23] : memref<8x1xf32, #tpu.memory_space<vmem>>, vector<8x1xf32>
      tpu.vector_store %arg4[%c0_22, %c0_23], %47 {strides = array<i32>} : memref<8x1xf32, #tpu.memory_space<vmem>>, vector<8x1xf32>,
    } else {
    }
    %c0 = arith.constant 0 : index
    %c0_1 = arith.constant 0 : index
    %3 = vector.load %arg2[%c0, %c0_1] : memref<8x256xf32, #tpu.memory_space<vmem>>, vector<8x256xf32>
    %c256_i32 = arith.constant 256 : i32
    %4 = arith.muli %arg1, %c256_i32 : i32
    %5 = tpu.iota {dimensions = array<i32: 1>} : vector<8x256xi32>
    %6 = vector.broadcast %4 : i32 to vector<8x256xi32>
    %7 = arith.addi %6, %5 : vector<8x256xi32>
    %c256_i32_2 = arith.constant 256 : i32
    %8 = vector.broadcast %c256_i32_2 : i32 to vector<8x256xi32>
    %9 = arith.cmpi slt, %7, %8 : vector<8x256xi32>
    %c256_i32_3 = arith.constant 256 : i32
    %10 = arith.subi %c256_i32_3, %4 : i32
    %c256_i32_4 = arith.constant 256 : i32
    %11 = arith.minsi %c256_i32_4, %10 : i32
    %12 = arith.sitofp %11 : i32 to f32
    %cst = arith.constant 0.000000e+00 : f32
    %13 = vector.broadcast %cst : f32 to vector<8x256xf32>
    %14 = arith.select %9, %3, %13 : vector<8x256xi1>, vector<8x256xf32>
    %cst_5 = arith.constant dense<0.000000e+00> : vector<8xf32>
    %15 = vector.multi_reduction <add>, %14, %cst_5 [1] : vector<8x256xf32> to vector<8xf32>
    %16 = vector.shape_cast %15 : vector<8xf32> to vector<8x1xf32>
    %17 = vector.broadcast %12 : f32 to vector<8x1xf32>
    %18 = arith.divf %16, %17 : vector<8x1xf32>
    %19 = vector.broadcast %18 : vector<8x1xf32> to vector<8x256xf32>
    %20 = arith.subf %3, %19 : vector<8x256xf32>
    %cst_6 = arith.constant 0.000000e+00 : f32
    %21 = vector.broadcast %cst_6 : f32 to vector<8x256xf32>
    %22 = arith.select %9, %20, %21 : vector<8x256xi1>, vector<8x256xf32>
    %23 = arith.mulf %22, %22 : vector<8x256xf32>
    %cst_7 = arith.constant dense<0.000000e+00> : vector<8xf32>
    %24 = vector.multi_reduction <add>, %23, %cst_7 [1] : vector<8x256xf32> to vector<8xf32>
    %25 = vector.shape_cast %24 : vector<8xf32> to vector<8x1xf32>
    %26 = arith.sitofp %4 : i32 to f32
    %27 = arith.addf %26, %12 : f32
    %c0_8 = arith.constant 0 : index
    %c0_9 = arith.constant 0 : index
    %28 = vector.load %arg3[%c0_8, %c0_9] : memref<8x1xf32, #tpu.memory_space<vmem>>, vector<8x1xf32>
    %29 = arith.subf %18, %28 : vector<8x1xf32>
    %c0_10 = arith.constant 0 : index
    %c0_11 = arith.constant 0 : index
    %30 = vector.load %arg3[%c0_10, %c0_11] : memref<8x1xf32, #tpu.memory_space<vmem>>, vector<8x1xf32>
    %31 = arith.divf %12, %27 : f32
    %32 = vector.broadcast %31 : f32 to vector<8x1xf32>
    %33 = arith.mulf %29, %32 : vector<8x1xf32>
    %34 = arith.addf %30, %33 : vector<8x1xf32>
    %c0_12 = arith.constant 0 : index
    %c0_13 = arith.constant 0 : index
    %35 = vector.load %arg3[%c0_12, %c0_13] : memref<8x1xf32, #tpu.memory_space<vmem>>, vector<8x1xf32>
    tpu.vector_store %arg3[%c0_12, %c0_13], %34 {strides = array<i32>} : memref<8x1xf32, #tpu.memory_space<vmem>>, vector<8x1xf32>,
    %c0_14 = arith.constant 0 : index
    %c0_15 = arith.constant 0 : index
    %36 = vector.load %arg4[%c0_14, %c0_15] : memref<8x1xf32, #tpu.memory_space<vmem>>, vector<8x1xf32>
    %37 = arith.mulf %29, %29 : vector<8x1xf32>
    %38 = arith.mulf %26, %12 : f32
    %39 = arith.divf %38, %27 : f32
    %40 = vector.broadcast %39 : f32 to vector<8x1xf32>
    %41 = arith.mulf %37, %40 : vector<8x1xf32>
    %42 = arith.addf %25, %41 : vector<8x1xf32>
    %43 = arith.addf %36, %42 : vector<8x1xf32>
    %c0_16 = arith.constant 0 : index
    %c0_17 = arith.constant 0 : index
    %44 = vector.load %arg4[%c0_16, %c0_17] : memref<8x1xf32, #tpu.memory_space<vmem>>, vector<8x1xf32>
    tpu.vector_store %arg4[%c0_16, %c0_17], %43 {strides = array<i32>} : memref<8x1xf32, #tpu.memory_space<vmem>>, vector<8x1xf32>,
    return
  }
  func.func @transform_0(%arg0: i32, %arg1: i32) -> (i32, i32) {
    %c0_i32 = arith.constant 0 : i32
    return %arg0, %arg1 : i32, i32
  }
  func.func @transform_1(%arg0: i32, %arg1: i32) -> (i32, i32) {
    %c0_i32 = arith.constant 0 : i32
    %c0_i32_0 = arith.constant 0 : i32
    return %arg0, %c0_i32 : i32, i32
  }
  func.func @transform_2(%arg0: i32, %arg1: i32) -> (i32, i32) {
    %c0_i32 = arith.constant 0 : i32
    %c0_i32_0 = arith.constant 0 : i32
    return %arg0, %c0_i32 : i32, i32
  }
}

</mosaic_0001>

<llo_original>
// kernel: tpu_custom_call.1
$region0: #{tpu_custom_call.1}
  #allocation0 [shape = 'u32[]', space=smem, size = 0x4, offset = 0x4, fixed_abs, tag = 'smem constant byte address 0x4 - core index']
  #allocation1 [shape = 'u32[144,128]{1,0:T(1,128)}', space=vmem, size = 0x12000, scoped, tag = 'internal scratch']
  %s0 = inlined_call_operand.hbm [shape: f32[8,256], index: 0, kind: input, shape index: {}]
  %s1 = inlined_call_operand.vmem [shape: f32[8,1], index: 1, kind: output, shape index: {0}]
  %s2 = inlined_call_operand.vmem [shape: f32[8,1], index: 2, kind: output, shape index: {1}]
  %3 = xla_tuple %s1, %s2
  %s4 = sld [smem:[#allocation0]]
  $region30: #{tpu_custom_call.1} parent=0
    _
  %s6 = ssub.s32 1, %s4
  %s7 = scalar_select 0, %s6, %s4
  $region1: #{tpu_custom_call.1} parent=0
    #allocation2 [shape = 'u8[8192]{0}', space=vmem, size = 0x2000, scoped, tag = 'input window, operand 0, single buffered']
    #allocation3 [shape = 's32[1]{0}', space=sflag, size = 0x4, scoped, tag = 'scoped memory for tpu_custom_call.1']
    %8 = vsyncpa [#allocation3], 0
    // Predicated region
    $region2: #{tpu_custom_call.1} parent=1 // pred_check
      _
    $region3: #{tpu_custom_call.1} parent=1 // pred_check_branch
      %10 = sbr.rel (0) target = $region5
    $region4: #{tpu_custom_call.1} parent=1 // pred_region
      %s12 = ssub.s32 256, 256
      %13 = vsyncadd [#allocation3], %s12
      %s15 = sshll.u32 [#allocation2], 4
      %s16 = int_to_ptr.vmem [resolvable:$true] %s15
      %18 = dma.hbm_to_vmem [thread:$0]  %s0, 256, %s16, [#allocation3]
    $region5: #{tpu_custom_call.1} parent=1 // pred_fallthru
      _
    // Predicated region
    $region6: #{tpu_custom_call.1} parent=1 // pred_check
      _
    $region7: #{tpu_custom_call.1} parent=1 // pred_check_branch
      %20 = sbr.rel (0) target = $region9
    $region8: #{tpu_custom_call.1} parent=1 // pred_region
      %21 = dma.done [#allocation3], 256
    $region9: #{tpu_custom_call.1} parent=1 // pred_fallthru
      _
    %p22 = scmp.eq.s32.totalorder 0, 0
    // Predicated region
    $region10: #{tpu_custom_call.1} parent=1 // pred_check
      %p23 = pneg %p22
    $region11: #{tpu_custom_call.1} parent=1 // pred_check_branch
      %25 = sbr.rel (%p23) target = $region13
    $region12: #{tpu_custom_call.1} parent=1 // pred_region
      %vm26 = vcmask 7168
      %27 = vst.msk [vmem:[%s1] sm:$0xff] %vm26, 0.0
      %28 = vst.msk [vmem:[%s2] sm:$0xff] %vm26, 0.0
    $region13: #{tpu_custom_call.1} parent=1 // pred_fallthru
      _
    %v29 = vld [vmem:[#allocation2] sm:$0xff]
    %v30 = vld [vmem:[#allocation2 + $0x8] sm:$0xff]
    %s31 = smul.u32 0, 256
    %v32 = vlaneseq
    %v33 = vand.u32 %v32, 127
    %v34 = vadd.s32 %v33, 128
    %v35 = vstv %s31
    %v36 = vadd.s32 %v35, %v33
    %v37 = vadd.s32 %v35, %v34
    %vm38 = vcmp.lt.s32.totalorder %v36, 256
    %vm39 = vcmp.lt.s32.totalorder %v37, 256
    %s40 = ssub.s32 256, %s31
    %p41 = scmp.lt.s32.totalorder %s40, 256
    %s42 = scalar_select %p41, %s40, 256
    %s43 = scvt.s32.f32 %s42
    %v44 = vsel %vm38, %v29, 0.0
    %v45 = vsel %vm39, %v30, 0.0
    %v46 = vadd.f32 %v44, %v45
    %47 = vadd.xlane.f32.xlu0 %v46
    %v48 = vpop.xlane.xlu0 %47
    %v49 = vstv %s43
    %v50 = vrcp.pop %v49
    %v51 = vmul.f32 %v48, %v50
    %v52 = vsub.f32 %v29, %v51
    %v53 = vsub.f32 %v30, %v51
    %v54 = vsel %vm38, %v52, 0.0
    %v55 = vsel %vm39, %v53, 0.0
    %v56 = vmul.f32 %v54, %v54
    %v57 = vmul.f32 %v55, %v55
    %v58 = vadd.f32 %v56, %v57
    %59 = vadd.xlane.f32.xlu0 %v58
    %v60 = vpop.xlane.xlu0 %59
    %s61 = scvt.s32.f32 %s31
    %s62 = sadd.f32 %s61, %s43
    %v63 = vld [vmem:[%s1] sm:$0xff]
    %v64 = vsub.f32 %v51, %v63
    %v65 = vstv %s62
    %v66 = vrcp.pop %v65
    %s67 = vtos %v66
    %s68 = smul.f32 %s43, %s67
    %v69 = vstv %s68
    %v70 = vmul.f32 %v64, %v69
    %v71 = vadd.f32 %v63, %v70
    %vm72 = vcmask 7168
    %73 = vst.msk [vmem:[%s1] sm:$0xff] %vm72, %v71
    %v74 = vld [vmem:[%s2] sm:$0xff]
    %v75 = vmul.f32 %v64, %v64
    %s76 = smul.f32 %s61, %s43
    %v77 = vstv %s62
    %v78 = vrcp.pop %v77
    %s79 = vtos %v78
    %s80 = smul.f32 %s76, %s79
    %v81 = vstv %s80
    %v82 = vmul.f32 %v75, %v81
    %v83 = vadd.f32 %v60, %v82
    %v84 = vadd.f32 %v74, %v83
    %85 = vst.msk [vmem:[%s2] sm:$0xff] %vm72, %v84
    // Predicated region
    $region14: #{tpu_custom_call.1} parent=1 // pred_check
      _
    $region15: #{tpu_custom_call.1} parent=1 // pred_check_branch
      %87 = sbr.rel (0) target = $region17
    $region16: #{tpu_custom_call.1} parent=1 // pred_region
      _
    $region17: #{tpu_custom_call.1} parent=1 // pred_fallthru
      _
    // Predicated region
    $region18: #{tpu_custom_call.1} parent=1 // pred_check
      _
    $region19: #{tpu_custom_call.1} parent=1 // pred_check_branch
      %89 = sbr.rel (0) target = $region21
    $region20: #{tpu_custom_call.1} parent=1 // pred_region
      _
    $region21: #{tpu_custom_call.1} parent=1 // pred_fallthru
      _
    // Predicated region
    $region22: #{tpu_custom_call.1} parent=1 // pred_check
      _
    $region23: #{tpu_custom_call.1} parent=1 // pred_check_branch
      %91 = sbr.rel (0) target = $region25
    $region24: #{tpu_custom_call.1} parent=1 // pred_region
      _
    $region25: #{tpu_custom_call.1} parent=1 // pred_fallthru
      _
    // Predicated region
    $region26: #{tpu_custom_call.1} parent=1 // pred_check
      _
    $region27: #{tpu_custom_call.1} parent=1 // pred_check_branch
      %93 = sbr.rel (0) target = $region29
    $region28: #{tpu_custom_call.1} parent=1 // pred_region
      _
    $region29: #{tpu_custom_call.1} parent=1 // pred_fallthru
      _
    %94 = vsyncpa [#allocation3], 1

</llo_original>
